<compile_context>
chip_gen: v5e
topology: v5e:2x2
jax: 0.10.0
libtpu: 0.0.40
codegen_flags: <defaults>
</compile_context>

<pallas_src>
import functools
import math

import jax
import jax.numpy as jnp
from jax.experimental import pallas as pl
from jax.experimental.pallas import tpu as pltpu


def _round_up(v, m):
    return ((v + m - 1) // m) * m


def _vmem_capacity_bytes():
    """Physical VMEM per TensorCore; conservative fallback if unqueryable."""
    try:
        return int(pltpu.get_tpu_info().vmem_capacity_bytes)
    except Exception:
        return 64 * 1024 * 1024  # v7x floor


def _lora_kernel(x_ref, a_ref, b_ref, o_ref, t_ref, *, lhs_dtype):
    # x_ref: (tm, fan_in), a_ref: (fan_in, rank), b_ref: (rank, tn),
    # o_ref: (tm, tn), t_ref: (tm, rank) f32 scratch.
    #
    # First matmul only on the first fan_out tile of each M tile; the result
    # is cached in VMEM scratch and reused across the (arbitrary) j axis.
    @pl.when(pl.program_id(1) == 0)
    def _():
        t_ref[...] = jnp.dot(
            x_ref[...], a_ref[...], preferred_element_type=jnp.float32
        )

    # bf16 LHS for the second matmul when inputs are bf16 (native MXU rate);
    # accumulation stays f32 via preferred_element_type.
    t = t_ref[...].astype(lhs_dtype)
    o_ref[...] = jnp.dot(
        t, b_ref[...], preferred_element_type=jnp.float32
    ).astype(o_ref.dtype)


def _pick_tiles(M, fan_in, fan_out, rank, itemsize, budget):
    """Pick (tm, tn) so all (double-buffered) VMEM buffers fit `budget` bytes."""
    # Sublane multiple: 8 for f32, 16 for bf16, 32 for int8.
    sub = 8 * max(1, 4 // max(1, itemsize))

    def buf_bytes(tm_, tn_):
        return (
            2 * tm_ * fan_in * itemsize      # x tile, double-buffered
            + 2 * tm_ * tn_ * itemsize       # out tile, double-buffered
            + 2 * fan_in * rank * itemsize   # A^T (resident; counted x2)
            + 2 * rank * tn_ * itemsize      # B^T tile, double-buffered
            + tm_ * rank * 4                 # f32 scratch for t
        )

    tm = min(512, _round_up(M, sub))
    # Megacore (v7x): keep >= 2 M tiles so both TensorCores get work.
    if M >= 2 * sub:
        tm = min(tm, max(sub, _round_up((M + 1) // 2, sub)))

    # Prefer tn = fan_out (first matmul never redone, widest lane-dense
    # stores, B^T fully resident); fall back to large multiples of 128.
    tn_candidates = [fan_out]
    for c in (512, 256, 128):
        if fan_out > c and fan_out % c == 0:
            tn_candidates.append(c)

    for tn in tn_candidates:
        if buf_bytes(tm, tn) <= budget:
            return tm, tn

    tn = tn_candidates[-1]
    while tm > sub and buf_bytes(tm, tn) > budget:
        tm = max(sub, _round_up(tm // 2, sub))
    return tm, tn


def lora_forward(x, lora_A, lora_B, lora_alpha=1, tm=None, tn=None):
    """LoRA forward: x @ A^T @ B^T * (alpha / rank).

    x:      (..., fan_in)
    lora_A: (rank, fan_in)
    lora_B: (fan_out, rank)
    returns (..., fan_out) in x.dtype
    """
    rank, fan_in = lora_A.shape
    fan_out, rank_b = lora_B.shape
    assert rank_b == rank, "lora_A / lora_B rank mismatch"
    scaling = lora_alpha / rank

    lead_shape = x.shape[:-1]
    M = int(math.prod(lead_shape)) if lead_shape else 1
    x2d = x.reshape(M, fan_in)

    out_dtype = x.dtype
    itemsize = jnp.dtype(x.dtype).itemsize

    vmem_cap = _vmem_capacity_bytes()
    # Tile budget ~45% of physical VMEM: leaves headroom for Mosaic internal
    # scratch on 64 MiB v7x while using most of the 128 MiB on v5e/v6e.
    budget = int(vmem_cap * 0.45)
    auto_tm, auto_tn = _pick_tiles(M, fan_in, fan_out, rank, itemsize, budget)
    if tm is None:
        tm = auto_tm
    if tn is None:
        tn = auto_tn
    assert fan_out % tn == 0, "tn must divide fan_out"

    # One-time transposes of the tiny adapters -> MXU-native layouts; fold the
    # alpha/rank scale into B^T once (tiny O(rank*fan_out) wrapper op).
    a_t = lora_A.T                                              # (fan_in, rank)
    b_t = lora_B.T * jnp.asarray(scaling, dtype=lora_B.dtype)   # (rank, fan_out)

    lhs_dtype = jnp.bfloat16 if x.dtype == jnp.bfloat16 else jnp.float32
    kernel = functools.partial(_lora_kernel, lhs_dtype=lhs_dtype)

    grid = (pl.cdiv(M, tm), fan_out // tn)

    # VMEM estimate: double-buffered x/out tiles + (conservatively x2)
    # adapters + f32 scratch + slack; clamped generation-aware.
    vmem_bytes = (
        2 * tm * fan_in * itemsize
        + 2 * tm * tn * jnp.dtype(out_dtype).itemsize
        + 2 * fan_in * rank * jnp.dtype(a_t.dtype).itemsize
        + 2 * rank * tn * jnp.dtype(b_t.dtype).itemsize
        + tm * rank * 4
        + (2 << 20)
    )
    vmem_bytes = int(min(max(vmem_bytes, 4 << 20), int(vmem_cap * 0.85)))

    flops = 2 * M * rank * (fan_in + fan_out)
    bytes_accessed = (
        M * fan_in * itemsize
        + M * fan_out * jnp.dtype(out_dtype).itemsize
        + a_t.size * jnp.dtype(a_t.dtype).itemsize
        + b_t.size * jnp.dtype(b_t.dtype).itemsize
    )

    out2d = pl.pallas_call(
        kernel,
        out_shape=jax.ShapeDtypeStruct((M, fan_out), out_dtype),
        grid_spec=pltpu.PrefetchScalarGridSpec(
            num_scalar_prefetch=0,
            grid=grid,
            in_specs=[
                pl.BlockSpec((tm, fan_in), lambda i, j: (i, 0)),
                pl.BlockSpec((fan_in, rank), lambda i, j: (0, 0)),  # A^T resident
                pl.BlockSpec((rank, tn), lambda i, j: (0, j)),      # B^T (tiled on N)
            ],
            out_specs=pl.BlockSpec((tm, tn), lambda i, j: (i, j)),
            scratch_shapes=[pltpu.VMEM((tm, rank), jnp.float32)],   # cached t
        ),
        compiler_params=pltpu.CompilerParams(
            # j reuses the cached t scratch across steps -> must be "arbitrary".
            dimension_semantics=("parallel", "arbitrary"),
            vmem_limit_bytes=vmem_bytes,
        ),
        cost_estimate=pl.CostEstimate(
            flops=flops, transcendentals=0, bytes_accessed=bytes_accessed
        ),
    )(x2d, a_t, b_t)

    return out2d.reshape(*lead_shape, fan_out)


if __name__ == "__main__":
    # Small shapes consistent with the module (fan_in/fan_out of a Linear,
    # rank=4 LoRA adapter, batched sequence input).
    batch, seq = 2, 8
    fan_in, fan_out, rank = 32, 48, 4
    lora_alpha = 1

    key = jax.random.PRNGKey(0)
    kx, ka, kb, kx2 = jax.random.split(key, 4)

    x = jax.random.normal(kx, (batch, seq, fan_in), dtype=jnp.float32)

    # Deterministic synthetic parameters.
    # lora_A: kaiming_uniform_(a=sqrt(5)) equivalent -> U(-bound, bound),
    #         bound = sqrt(6 / ((1 + a^2) * fan_in)) = 1/sqrt(fan_in).
    bound = 1.0 / math.sqrt(fan_in)
    lora_A = jax.random.uniform(
        ka, (rank, fan_in), minval=-bound, maxval=bound, dtype=jnp.float32
    )
    # The module initializes lora_B to zeros (output identically 0); use small
    # random values here so the kernel computation is exercised.
    lora_B = 0.02 * jax.random.normal(kb, (fan_out, rank), dtype=jnp.float32)

    scaling = lora_alpha / rank

    # Case 1: nice shapes.
    out = lora_forward(x, lora_A, lora_B, lora_alpha=lora_alpha)
    out = jax.block_until_ready(out)
    ref = (x @ lora_A.T @ lora_B.T) * scaling
    assert out.shape == (batch, seq, fan_out)
    assert jnp.allclose(out, ref, atol=1e-5, rtol=1e-5), "mismatch vs reference"

    # Case 2: ragged leading dim (exercises the partial edge-block path).
    x_odd = jax.random.normal(kx2, (3, 5, fan_in), dtype=jnp.float32)
    out_odd = lora_forward(x_odd, lora_A, lora_B, lora_alpha=lora_alpha)
    out_odd = jax.block_until_ready(out_odd)
    ref_odd = (x_odd @ lora_A.T @ lora_B.T) * scaling
    assert out_odd.shape == (3, 5, fan_out)
    assert jnp.allclose(out_odd, ref_odd, atol=1e-5, rtol=1e-5), "ragged mismatch"

    print("KERNEL_OK")
</pallas_src>

<mosaic_0001>
module attributes {stable_mosaic.version = 11 : i64} {
  func.func @_lora_kernel(%arg0: i32, %arg1: i32, %arg2: memref<8x32xf32, #tpu.memory_space<vmem>>, %arg3: memref<32x4xf32, #tpu.memory_space<vmem>>, %arg4: memref<4x48xf32, #tpu.memory_space<vmem>>, %arg5: memref<8x48xf32, #tpu.memory_space<vmem>>, %arg6: memref<8x4xf32, #tpu.memory_space<vmem>>) attributes {dimension_semantics = [#tpu.dimension_semantics<parallel>, #tpu.dimension_semantics<arbitrary>], iteration_bounds = array<i64: 2, 1>, scalar_prefetch = 0 : i64, scratch_operands = 1 : i64, tpu.core_type = #tpu.core_type<tc>, window_params = [{transform_indices = @transform_0, window_bounds = array<i64: 8, 32>}, {pipeline_mode = #tpu.pipeline_mode<synchronous>, transform_indices = @transform_1, window_bounds = array<i64: 32, 4>}, {transform_indices = @transform_2, window_bounds = array<i64: 4, 48>}, {transform_indices = @transform_3, window_bounds = array<i64: 8, 48>}]} {
    %c0_i32 = arith.constant 0 : i32
    %0 = arith.cmpi eq, %arg1, %c0_i32 : i32
    %1 = arith.extui %0 : i1 to i32
    %c0_i32_0 = arith.constant 0 : i32
    %2 = arith.cmpi ne, %1, %c0_i32_0 : i32
    scf.if %2 {
      %c0_6 = arith.constant 0 : index
      %c0_7 = arith.constant 0 : index
      %7 = vector.load %arg2[%c0_6, %c0_7] : memref<8x32xf32, #tpu.memory_space<vmem>>, vector<8x32xf32>
      %c0_8 = arith.constant 0 : index
      %c0_9 = arith.constant 0 : index
      %8 = vector.load %arg3[%c0_8, %c0_9] : memref<32x4xf32, #tpu.memory_space<vmem>>, vector<32x4xf32>
      %cst_10 = arith.constant dense<0.000000e+00> : vector<8x4xf32>
      %9 = tpu.matmul %7, %8, %cst_10 {dimension_numbers = #tpu.dot_dimension_numbers<[1], [0], [0], [1], [0, 0, 1, 1], [], []>} : vector<8x32xf32>, vector<32x4xf32>, vector<8x4xf32> -> vector<8x4xf32>
      %c0_11 = arith.constant 0 : index
      %c0_12 = arith.constant 0 : index
      %10 = vector.load %arg6[%c0_11, %c0_12] : memref<8x4xf32, #tpu.memory_space<vmem>>, vector<8x4xf32>
      tpu.vector_store %arg6[%c0_11, %c0_12], %9 {strides = array<i32>} : memref<8x4xf32, #tpu.memory_space<vmem>>, vector<8x4xf32>,
    } else {
    }
    %c0 = arith.constant 0 : index
    %c0_1 = arith.constant 0 : index
    %3 = vector.load %arg6[%c0, %c0_1] : memref<8x4xf32, #tpu.memory_space<vmem>>, vector<8x4xf32>
    %c0_2 = arith.constant 0 : index
    %c0_3 = arith.constant 0 : index
    %4 = vector.load %arg4[%c0_2, %c0_3] : memref<4x48xf32, #tpu.memory_space<vmem>>, vector<4x48xf32>
    %cst = arith.constant dense<0.000000e+00> : vector<8x48xf32>
    %5 = tpu.matmul %3, %4, %cst {dimension_numbers = #tpu.dot_dimension_numbers<[1], [0], [0], [1], [0, 0, 1, 1], [], []>} : vector<8x4xf32>, vector<4x48xf32>, vector<8x48xf32> -> vector<8x48xf32>
    %c0_4 = arith.constant 0 : index
    %c0_5 = arith.constant 0 : index
    %6 = vector.load %arg5[%c0_4, %c0_5] : memref<8x48xf32, #tpu.memory_space<vmem>>, vector<8x48xf32>
    tpu.vector_store %arg5[%c0_4, %c0_5], %5 {strides = array<i32>} : memref<8x48xf32, #tpu.memory_space<vmem>>, vector<8x48xf32>,
    return
  }
  func.func @transform_0(%arg0: i32, %arg1: i32) -> (i32, i32) {
    %c0_i32 = arith.constant 0 : i32
    %c0_i32_0 = arith.constant 0 : i32
    return %arg0, %c0_i32 : i32, i32
  }
  func.func @transform_1(%arg0: i32, %arg1: i32) -> (i32, i32) {
    %c0_i32 = arith.constant 0 : i32
    %c0_i32_0 = arith.constant 0 : i32
    %c0_i32_1 = arith.constant 0 : i32
    return %c0_i32, %c0_i32_0 : i32, i32
  }
  func.func @transform_2(%arg0: i32, %arg1: i32) -> (i32, i32) {
    %c0_i32 = arith.constant 0 : i32
    %c0_i32_0 = arith.constant 0 : i32
    return %c0_i32, %arg1 : i32, i32
  }
  func.func @transform_3(%arg0: i32, %arg1: i32) -> (i32, i32) {
    %c0_i32 = arith.constant 0 : i32
    return %arg0, %arg1 : i32, i32
  }
}

</mosaic_0001>

<llo_original>
// kernel: tpu_custom_call.1
$region0: #{tpu_custom_call.1}
  #allocation0 [shape = 'u32[]', space=smem, size = 0x4, offset = 0x4, fixed_abs, tag = 'smem constant byte address 0x4 - core index']
  #allocation1 [shape = 'u32[72,128]{1,0:T(1,128)}', space=vmem, size = 0x9000, scoped, tag = 'internal scratch']
  #allocation2 [shape = 'f32[8,4]{1,0:T(8,128)}', space=vmem, size = 0x1000, scoped, tag = 'scratch operand']
  %s0 = inlined_call_operand.vmem [shape: f32[16,32], index: 0, kind: input, shape index: {}]
  %s1 = inlined_call_operand.vmem [shape: f32[32,4], index: 1, kind: input, shape index: {}]
  %s2 = inlined_call_operand.vmem [shape: f32[4,48], index: 2, kind: input, shape index: {}]
  %s3 = inlined_call_operand.hbm [shape: f32[16,48], index: 3, kind: output, shape index: {}]
  %s4 = sld [smem:[#allocation0]]
  $region49: #{tpu_custom_call.1} parent=0
    _
  %s6 = ssub.s32 1, %s4
  %s7 = scalar_select 0, %s6, %s4
  $region1: #{tpu_custom_call.1} parent=0
    #allocation3 [shape = 'u8[8192]{0}', space=vmem, size = 0x2000, scoped, tag = 'output window, operand 0']
    #allocation4 [shape = 's32[2]{0}', space=sflag, size = 0x8, scoped, tag = 'scoped memory for tpu_custom_call.1']
    %8 = vsyncpa [#allocation4], 0
    %s9 = scalar_lea.sflag [#allocation4], 1
    %10 = vsyncpa %s9, 0
    loop: start=0, step=1, limit=4
    $region2: #{tpu_custom_call.1} parent=1 // loop_pre_header
      _
    $region3: #{tpu_custom_call.1} parent=1 // loop_header
      %s12 = sphi 0, %s16
      %p13 = scmp.ge.s32.totalorder %s12, 4
      %s19 = sphi 0, %s31
      %s20 = sphi 0, %s27
      %s21 = sphi 0, %s19
      %s22 = sphi 0, %s20
      %s23 = sphi 0, %s21
      %s24 = sphi 0, %s22
      %s34 = sphi 0, %s36
      %s37 = sphi 0, %s34
      %s38 = sphi 0, %s37
      %s54 = sphi 0, %s38
      %s58 = sphi 0, %s58
      %s60 = sphi 0, %s58
      %s61 = sphi 0, %s60
      %s75 = sphi 0, %s61
      %s81 = sphi 0, %s83
      %s84 = sphi 0, %s81
      %s85 = sphi 0, %s84
      %s101 = sphi 0, %s85
      %s109 = sphi 0, %s111
      %s112 = sphi 0, %s109
      %s113 = sphi 0, %s112
      %s129 = sphi 0, %s113
    $region4: #{tpu_custom_call.1} parent=1 // loop_header_branch
      %15 = sbr.rel (%p13) target = $region8
    $region5: #{tpu_custom_call.1} parent=1 // loop_body
      %s17 = ssub.s32 %s12, 1
      %s18 = ssub.s32 %s12, 2
      %s25 = sadd.s32 1, %s20
      %p26 = scmp.ge.s32.totalorder %s25, 1
      %s27 = scalar_select %p26, 0, %s25
      %s28 = sadd.s32 1, %s19
      %s29 = scalar_select %p26, %s28, %s19
      %p30 = scmp.ge.s32.totalorder %s29, 2
      %s31 = scalar_select %p30, 0, %s29
      %s32 = ssub.s32 %s19, %s31
      %p33 = scmp.eq.s32.totalorder %s32, 0
      %s35 = sadd.s32 %s34, 1
      %s36 = scalar_select %p33, %s34, %s35
      %p39 = pneg %p33
      %p40 = scmp.eq.s32.totalorder %s12, 1
      %p41 = por %p39, %p40
      %p42 = scmp.ne.s32.totalorder %s34, %s37
      %p43 = scmp.eq.s32.totalorder %s12, 0
      %p44 = por %p42, %p43
      %p45 = scmp.ne.s32.totalorder %s34, %s37
      %p46 = scmp.eq.s32.totalorder %s17, 1
      %p47 = por %p45, %p46
      %p48 = scmp.ne.s32.totalorder %s37, %s38
      %p49 = scmp.eq.s32.totalorder %s17, 0
      %p50 = por %p48, %p49
      %p51 = scmp.ne.s32.totalorder %s37, %s38
      %p52 = scmp.eq.s32.totalorder %s18, 1
      %p53 = por %p51, %p52
      %p55 = scmp.ne.s32.totalorder %s38, %s54
      %p56 = scmp.eq.s32.totalorder %s18, 0
      %p57 = por %p55, %p56
      %s59 = sadd.s32 %s58, 1
      %p62 = scmp.eq.s32.totalorder %s12, 1
      %p63 = scmp.ne.s32.totalorder %s58, %s60
      %p64 = scmp.eq.s32.totalorder %s12, 0
      %p65 = por %p63, %p64
      %p66 = scmp.ne.s32.totalorder %s58, %s60
      %p67 = scmp.eq.s32.totalorder %s17, 1
      %p68 = por %p66, %p67
      %p69 = scmp.ne.s32.totalorder %s60, %s61
      %p70 = scmp.eq.s32.totalorder %s17, 0
      %p71 = por %p69, %p70
      %p72 = scmp.ne.s32.totalorder %s60, %s61
      %p73 = scmp.eq.s32.totalorder %s18, 1
      %p74 = por %p72, %p73
      %p76 = scmp.ne.s32.totalorder %s61, %s75
      %p77 = scmp.eq.s32.totalorder %s18, 0
      %p78 = por %p76, %p77
      %s79 = ssub.s32 %s20, %s27
      %p80 = scmp.eq.s32.totalorder %s79, 0
      %s82 = sadd.s32 %s81, 1
      %s83 = scalar_select %p80, %s81, %s82
      %p86 = pneg %p80
      %p87 = scmp.eq.s32.totalorder %s12, 1
      %p88 = por %p86, %p87
      %p89 = scmp.ne.s32.totalorder %s81, %s84
      %p90 = scmp.eq.s32.totalorder %s12, 0
      %p91 = por %p89, %p90
      %p92 = scmp.ne.s32.totalorder %s81, %s84
      %p93 = scmp.eq.s32.totalorder %s17, 1
      %p94 = por %p92, %p93
      %p95 = scmp.ne.s32.totalorder %s84, %s85
      %p96 = scmp.eq.s32.totalorder %s17, 0
      %p97 = por %p95, %p96
      %p98 = scmp.ne.s32.totalorder %s84, %s85
      %p99 = scmp.eq.s32.totalorder %s18, 1
      %p100 = por %p98, %p99
      %p102 = scmp.ne.s32.totalorder %s85, %s101
      %p103 = scmp.eq.s32.totalorder %s18, 0
      %p104 = por %p102, %p103
      %s105 = ssub.s32 %s19, %s31
      %s106 = ssub.s32 %s20, %s27
      %s107 = sor.u32 %s105, %s106
      %p108 = scmp.eq.s32.totalorder %s107, 0
      %s110 = sadd.s32 %s109, 1
      %s111 = scalar_select %p108, %s109, %s110
      %p114 = pneg %p108
      %p115 = scmp.eq.s32.totalorder %s12, 1
      %p116 = por %p114, %p115
      %p117 = scmp.ne.s32.totalorder %s109, %s112
      %p118 = scmp.eq.s32.totalorder %s12, 0
      %p119 = por %p117, %p118
      %p120 = scmp.ne.s32.totalorder %s109, %s112
      %p121 = scmp.eq.s32.totalorder %s17, 1
      %p122 = por %p120, %p121
      %p123 = scmp.ne.s32.totalorder %s112, %s113
      %p124 = scmp.eq.s32.totalorder %s17, 0
      %p125 = por %p123, %p124
      %p126 = scmp.ne.s32.totalorder %s112, %s113
      %p127 = scmp.eq.s32.totalorder %s18, 1
      %p128 = por %p126, %p127
      %p130 = scmp.ne.s32.totalorder %s113, %s129
      %p131 = scmp.eq.s32.totalorder %s18, 0
      %p132 = por %p130, %p131
      %p133 = scmp.le.s32.totalorder 1, %s12
      %p134 = scmp.lt.s32.totalorder %s12, 3
      %p135 = pnand %p133, %p134
      %p136 = pneg %p135
      // Predicated region
      $region9: #{tpu_custom_call.1} parent=5 // pred_check
        _
      $region10: #{tpu_custom_call.1} parent=5 // pred_check_branch
        %138 = sbr.rel (%p135) target = $region12
      $region11: #{tpu_custom_call.1} parent=5 // pred_region
        %s139 = ssub.s32 %s12, 1
        // Predicated region
        $region13: #{tpu_custom_call.1} parent=11 // pred_check
          %p140 = pneg %p71
        $region14: #{tpu_custom_call.1} parent=11 // pred_check_branch
          %142 = sbr.rel (%p140) target = $region16
        $region15: #{tpu_custom_call.1} parent=11 // pred_region
          _
        $region16: #{tpu_custom_call.1} parent=11 // pred_fallthru
          _
        // Predicated region
        $region17: #{tpu_custom_call.1} parent=11 // pred_check
          %p143 = pneg %p97
        $region18: #{tpu_custom_call.1} parent=11 // pred_check_branch
          %145 = sbr.rel (%p143) target = $region20
        $region19: #{tpu_custom_call.1} parent=11 // pred_region
          %p146 = scmp.lt.s32.totalorder %s22, 0
          %s147 = scalar_select %p146, %s22, 0
          %s148 = smul.addr %s147, 4
          %s149 = scalar_lea.vmem %s2, %s148
        $region20: #{tpu_custom_call.1} parent=11 // pred_fallthru
          _
      $region12: #{tpu_custom_call.1} parent=5 // pred_fallthru
        _
      %p150 = scmp.lt.s32.totalorder %s12, 2
      // Predicated region
      $region21: #{tpu_custom_call.1} parent=5 // pred_check
        %p151 = pneg %p150
      $region22: #{tpu_custom_call.1} parent=5 // pred_check_branch
        %153 = sbr.rel (%p151) target = $region24
      $region23: #{tpu_custom_call.1} parent=5 // pred_region
        // Predicated region
        $region25: #{tpu_custom_call.1} parent=23 // pred_check
          %p154 = pneg %p44
        $region26: #{tpu_custom_call.1} parent=23 // pred_check_branch
          %156 = sbr.rel (%p154) target = $region28
        $region27: #{tpu_custom_call.1} parent=23 // pred_region
          %p157 = scmp.lt.s32.totalorder %s19, 1
          %s158 = scalar_select %p157, %s19, 1
          %s159 = smul.addr %s158, 8
          %s160 = scalar_lea.vmem %s0, %s159
        $region28: #{tpu_custom_call.1} parent=23 // pred_fallthru
          _
      $region24: #{tpu_custom_call.1} parent=5 // pred_fallthru
        _
      %p161 = scmp.le.s32.totalorder 1, %s12
      %p162 = scmp.lt.s32.totalorder %s12, 3
      %p163 = pnand %p161, %p162
      %p164 = pneg %p163
      // Predicated region
      $region29: #{tpu_custom_call.1} parent=5 // pred_check
        _
      $region30: #{tpu_custom_call.1} parent=5 // pred_check_branch
        %166 = sbr.rel (%p163) target = $region32
      $region31: #{tpu_custom_call.1} parent=5 // pred_region
        %s167 = ssub.s32 %s12, 1
        %p168 = scmp.lt.s32.totalorder %s21, 1
        %s169 = scalar_select %p168, %s21, 1
        %s170 = smul.addr %s169, 8
        %s171 = scalar_lea.vmem %s0, %s170
        %p172 = pneg %p50
        %p173 = pneg %p47
        %p174 = pneg %p71
        %p175 = pneg %p68
        %p176 = scmp.lt.s32.totalorder %s22, 0
        %s177 = scalar_select %p176, %s22, 0
        %s178 = smul.addr %s177, 4
        %s179 = scalar_lea.vmem %s2, %s178
        %p180 = pneg %p97
        %p181 = pneg %p94
        %p182 = pneg %p125
        %p183 = pneg %p122
        %s184 = sand.u32 %s112, 1
        %s185 = scalar_lea.sflag [#allocation4], %s184
        %s186 = sand.u32 %s112, 1
        %s187 = smul.addr %s186, 8
        %s188 = scalar_lea.vmem [#allocation3], %s187
        %p189 = scmp.lt.s32.totalorder %s21, 1
        %s190 = scalar_select %p189, %s21, 1
        %s191 = smul.addr %s190, 8
        %s192 = scalar_lea.vmem %s0, %s191
        %p193 = scmp.lt.s32.totalorder %s22, 0
        %s194 = scalar_select %p193, %s22, 0
        %s195 = smul.addr %s194, 4
        %s196 = scalar_lea.vmem %s2, %s195
        %p197 = scmp.eq.s32.totalorder %s22, 0
        // Predicated region
        $region33: #{tpu_custom_call.1} parent=31 // pred_check
          %p198 = pneg %p197
        $region34: #{tpu_custom_call.1} parent=31 // pred_check_branch
          %200 = sbr.rel (%p198) target = $region36
        $region35: #{tpu_custom_call.1} parent=31 // pred_region
          %v201 = vld [vmem:[%s192] sm:$0xff]
          %v202 = vld [vmem:[%s1] sm:$0xff]
          %v203 = vld [vmem:[%s1 + $0x8] sm:$0xff]
          %v204 = vld [vmem:[%s1 + $0x10] sm:$0xff]
          %v205 = vld [vmem:[%s1 + $0x18] sm:$0xff]
          %vm206 = vcmask 261120
          %v208 = vsel %vm206, %v201, 0
          %210 = vmatpush.msra.mxu0 0.0
          %211 = vmatpush.msra.mxu0 0.0
          %212 = vmatpush.msra.mxu0 0.0
          %213 = vmatpush.msra.mxu0 0.0
          %214 = vmatpush.msra.mxu0 0.0
          %215 = vmatpush.msra.mxu0 0.0
          %216 = vmatpush.msra.mxu0 0.0
          %217 = vmatpush.msra.mxu0 0.0
          %218 = vmatpush.msra.mxu0 0.0
          %219 = vmatpush.msra.mxu0 0.0
          %220 = vmatpush.msra.mxu0 0.0
          %221 = vmatpush.msra.mxu0 0.0
          %222 = vmatpush.msra.mxu0 %v205
          %223 = vmatpush.msra.mxu0 %v204
          %224 = vmatpush.msra.mxu0 %v203
          %225 = vmatpush.msra.mxu0 %v202
          %226 = vmatmul.f32.gmra.mxu0 %v208
          %v227 = vpop.f32.mrf.mxu0
          %v228 = vadd.f32 0.0, %v227
          %229 = vdwg.mxu0
          %vm230 = vcmask 31744
          %231 = vst.msk [vmem:[#allocation2] sm:$0xff] %vm230, %v228
        $region36: #{tpu_custom_call.1} parent=31 // pred_fallthru
          _
        %v232 = vld [vmem:[#allocation2] sm:$0xff]
        %v233 = vld [vmem:[%s196] sm:$0xf]
        %vm234 = vcmask 31744
        %v236 = vsel %vm234, %v232, 0
        %vm238 = vcmask 1043456
        %v240 = vsel %vm238, %v233, 0
        %242 = vmatpush.msra.mxu0 0.0
        %243 = vmatpush.msra.mxu0 0.0
        %244 = vmatpush.msra.mxu0 0.0
        %245 = vmatpush.msra.mxu0 0.0
        %246 = vmatpush.msra.mxu0 0.0
        %247 = vmatpush.msra.mxu0 0.0
        %248 = vmatpush.msra.mxu0 0.0
        %249 = vmatpush.msra.mxu0 0.0
        %250 = vmatpush.msra.mxu0 0.0
        %251 = vmatpush.msra.mxu0 0.0
        %252 = vmatpush.msra.mxu0 0.0
        %253 = vmatpush.msra.mxu0 0.0
        %254 = vmatpush.msra.mxu0 0.0
        %255 = vmatpush.msra.mxu0 0.0
        %256 = vmatpush.msra.mxu0 0.0
        %257 = vmatpush.msra.mxu0 %v240
        %258 = vmatmul.f32.gmra.mxu0 %v236
        %v259 = vpop.f32.mrf.mxu0
        %v260 = vadd.f32 0.0, %v259
        %261 = vdwg.mxu0
        %vm262 = vcmask 392192
        %263 = vst.msk [vmem:[%s188] sm:$0xff] %vm262, %v260
        %s264 = sand.u32 %s112, 1
        %s265 = scalar_lea.sflag [#allocation4], %s264
        %s266 = sand.u32 %s112, 1
        %s267 = smul.addr %s266, 8
        %s268 = scalar_lea.vmem [#allocation3], %s267
        // Predicated region
        $region37: #{tpu_custom_call.1} parent=31 // pred_check
          %p269 = pneg %p122
        $region38: #{tpu_custom_call.1} parent=31 // pred_check_branch
          %271 = sbr.rel (%p269) target = $region40
        $region39: #{tpu_custom_call.1} parent=31 // pred_region
          %273 = vsyncadd %s265, 0
          %s274 = sadd.s32 %s22, %s21
          %s275 = smul.addr %s274, 8
          %s276 = scalar_lea.hbm %s3, %s275
          %s278 = sshll.u32 %s268, 4
          %s279 = int_to_ptr.vmem [resolvable:$true] %s278
          %s280 = sshll.u32 %s276, 4
          %s281 = int_to_ptr.hbm [resolvable:$true] %s280
          %283 = dma.vmem_to_hbm [thread:$0]  %s279, 128, %s281, %s265
        $region40: #{tpu_custom_call.1} parent=31 // pred_fallthru
          _
      $region32: #{tpu_custom_call.1} parent=5 // pred_fallthru
        _
      %p284 = scmp.le.s32.totalorder 2, %s12
      // Predicated region
      $region41: #{tpu_custom_call.1} parent=5 // pred_check
        %p285 = pneg %p284
      $region42: #{tpu_custom_call.1} parent=5 // pred_check_branch
        %287 = sbr.rel (%p285) target = $region44
      $region43: #{tpu_custom_call.1} parent=5 // pred_region
        %s288 = ssub.s32 %s12, 2
        // Predicated region
        $region45: #{tpu_custom_call.1} parent=43 // pred_check
          %p289 = pneg %p128
        $region46: #{tpu_custom_call.1} parent=43 // pred_check_branch
          %291 = sbr.rel (%p289) target = $region48
        $region47: #{tpu_custom_call.1} parent=43 // pred_region
          %s292 = sand.u32 %s113, 1
          %s293 = scalar_lea.sflag [#allocation4], %s292
          %s294 = sand.u32 %s113, 1
          %s295 = smul.addr %s294, 8
          %s296 = scalar_lea.vmem [#allocation3], %s295
          %298 = dma.done %s293, 128
        $region48: #{tpu_custom_call.1} parent=43 // pred_fallthru
          _
      $region44: #{tpu_custom_call.1} parent=5 // pred_fallthru
        _
    $region6: #{tpu_custom_call.1} parent=1 // loop_footer
      %s16 = sadd.s32 1, %s12
    $region7: #{tpu_custom_call.1} parent=1 // loop_footer_branch
      %11 = sbr.rel target = $region3
    $region8: #{tpu_custom_call.1} parent=1 // loop_exit
      _
    %299 = vsyncpa [#allocation4], 1
    %s300 = scalar_lea.sflag [#allocation4], 1
    %301 = vsyncpa %s300, 1

</llo_original>
